<compile_context>
chip_gen: v5e
topology: v5e:2x2
jax: 0.10.0
libtpu: 0.0.40
codegen_flags: <defaults>
</compile_context>

<pallas_src>
import functools

import jax
import jax.numpy as jnp
from jax.experimental import pallas as pl
from jax.experimental.pallas import tpu as pltpu


# ----------------------- Fused cross-attention kernel -----------------------

def _cross_attn_kernel(x_ref, wkv_ref, wproj_ref, bproj_ref, o_ref, *,
                       num_heads, scale):
    # Block shapes:
    #   x_ref:     (2, 1, N, C)   -- x[0] = queries, x[1] = keys/values source
    #   wkv_ref:   (C, 2C)
    #   wproj_ref: (C, C)
    #   bproj_ref: (1, C)
    #   o_ref:     (1, N, C)
    N = o_ref.shape[1]
    C = o_ref.shape[2]
    Dh = C // num_heads

    x1 = x_ref[0, 0].astype(jnp.float32)          # (N, C) query tokens
    x2 = x_ref[1, 0].astype(jnp.float32)          # (N, C) key/value tokens

    # kv projection (qkv_bias=False): (N, C) @ (C, 2C) -> (N, 2C), all in VMEM.
    kv = jnp.dot(x2, wkv_ref[...].astype(jnp.float32),
                 preferred_element_type=jnp.float32)
    k = kv[:, :C]                                  # (N, C)
    v = kv[:, C:]                                  # (N, C)

    # Fold the softmax scale into q (cheaper than scaling the NxN scores).
    q = x1 * scale                                 # (N, C)

    # Per-head attention, statically unrolled; heads re-merged lane-dense.
    head_outs = []
    for h in range(num_heads):
        lo = h * Dh
        qh = q[:, lo:lo + Dh]                      # (N, Dh)
        kh = k[:, lo:lo + Dh]                      # (N, Dh)
        vh = v[:, lo:lo + Dh]                      # (N, Dh)

        # scores = qh @ kh^T  (contract over Dh)
        s = jax.lax.dot_general(
            qh, kh, (((1,), (1,)), ((), ())),
            preferred_element_type=jnp.float32)    # (N, N)

        # numerically-stable softmax over the last axis
        s = s - jnp.max(s, axis=-1, keepdims=True)
        p = jnp.exp(s)
        denom = jnp.sum(p, axis=-1, keepdims=True)
        p = p * pl.reciprocal(denom, approx=True)  # EUP reciprocal

        head_outs.append(
            jnp.dot(p, vh, preferred_element_type=jnp.float32))  # (N, Dh)

    o = jnp.concatenate(head_outs, axis=-1)        # (N, C) lane-dense merge

    # Output projection + bias, then a single contiguous (N, C) store.
    out = jnp.dot(o, wproj_ref[...].astype(jnp.float32),
                  preferred_element_type=jnp.float32)
    out = out + bproj_ref[...].astype(jnp.float32)
    o_ref[0] = out.astype(o_ref.dtype)


def cross_attention_forward(x, wkv, wproj, bproj, num_heads):
    """x: (2, B, N, C) stacked [queries, keys/values]. Returns (B, N, C)."""
    _, B, N, C = x.shape
    Dh = C // num_heads
    scale = Dh ** (-0.5)
    bproj2 = bproj.reshape(1, C)

    kern = functools.partial(_cross_attn_kernel,
                             num_heads=num_heads, scale=scale)

    return pl.pallas_call(
        kern,
        out_shape=jax.ShapeDtypeStruct((B, N, C), x.dtype),
        grid=(B,),
        in_specs=[
            # both x[0] and x[1] for batch element b in one block
            pl.BlockSpec((2, 1, N, C), lambda b: (0, b, 0, 0)),
            # weights: full arrays, resident across the whole grid
            pl.BlockSpec((C, 2 * C), lambda b: (0, 0)),
            pl.BlockSpec((C, C), lambda b: (0, 0)),
            pl.BlockSpec((1, C), lambda b: (0, 0)),
        ],
        out_specs=pl.BlockSpec((1, N, C), lambda b: (b, 0, 0)),
        compiler_params=pltpu.CompilerParams(
            dimension_semantics=("parallel",),   # megacore-shard over B (v7x)
        ),
    )(x, wkv, wproj, bproj2)


# -------------------------- Pure-JAX reference ------------------------------

def reference_forward(x, wkv, wproj, bproj, num_heads):
    x1, x2 = x[0], x[1]
    B, N, C = x1.shape
    Dh = C // num_heads
    scale = Dh ** (-0.5)
    q = x1.reshape(B, N, num_heads, Dh).transpose(0, 2, 1, 3)
    kv = (x2 @ wkv).reshape(B, N, 2, num_heads, Dh).transpose(2, 0, 3, 1, 4)
    k, v = kv[0], kv[1]
    attn = jnp.einsum("bhnd,bhmd->bhnm", q, k) * scale
    attn = jax.nn.softmax(attn, axis=-1)
    o = jnp.einsum("bhnm,bhmd->bhnd", attn, v)
    o = o.transpose(0, 2, 1, 3).reshape(B, N, C)
    return o @ wproj + bproj


# ----------------------------------- Main -----------------------------------

if __name__ == "__main__":
    B, N, C, H = 2, 8, 32, 8   # dim=32, num_heads=8 -> head_dim=4

    key = jax.random.PRNGKey(0)
    kx, kw1, kw2, kb = jax.random.split(key, 4)

    # Stacked cross-attention input: x[0] -> queries, x[1] -> keys/values.
    x = jax.random.normal(kx, (2, B, N, C), dtype=jnp.float32)

    # Deterministic synthetic parameters, stored as (in, out) for y = x @ W.
    wkv = 0.02 * jax.random.normal(kw1, (C, 2 * C), dtype=jnp.float32)
    wproj = 0.02 * jax.random.normal(kw2, (C, C), dtype=jnp.float32)
    bproj = 0.02 * jax.random.normal(kb, (C,), dtype=jnp.float32)

    out = jax.jit(
        functools.partial(cross_attention_forward, num_heads=H)
    )(x, wkv, wproj, bproj)
    out = jax.block_until_ready(out)

    ref = reference_forward(x, wkv, wproj, bproj, H)
    assert out.shape == (B, N, C)
    # Tolerance accounts for the approximate EUP reciprocal in the softmax.
    assert jnp.allclose(out, ref, atol=1e-3, rtol=1e-3), (
        f"max abs err {jnp.max(jnp.abs(out - ref))}"
    )

    print("KERNEL_OK")
</pallas_src>

<mosaic_0001>
module attributes {stable_mosaic.version = 11 : i64} {
  func.func @_cross_attn_kernel(%arg0: i32, %arg1: memref<2x1x8x32xf32, #tpu.memory_space<vmem>>, %arg2: memref<32x64xf32, #tpu.memory_space<vmem>>, %arg3: memref<32x32xf32, #tpu.memory_space<vmem>>, %arg4: memref<1x32xf32, #tpu.memory_space<vmem>>, %arg5: memref<1x8x32xf32, #tpu.memory_space<vmem>>) attributes {dimension_semantics = [#tpu.dimension_semantics<parallel>], iteration_bounds = array<i64: 2>, scalar_prefetch = 0 : i64, scratch_operands = 0 : i64, tpu.core_type = #tpu.core_type<tc>, window_params = [{transform_indices = @transform_0, window_bounds = array<i64: 2, 1, 8, 32>}, {pipeline_mode = #tpu.pipeline_mode<synchronous>, transform_indices = @transform_1, window_bounds = array<i64: 32, 64>}, {pipeline_mode = #tpu.pipeline_mode<synchronous>, transform_indices = @transform_2, window_bounds = array<i64: 32, 32>}, {pipeline_mode = #tpu.pipeline_mode<synchronous>, transform_indices = @transform_3, window_bounds = array<i64: 1, 32>}, {transform_indices = @transform_4, window_bounds = array<i64: 1, 8, 32>}]} {
    %c0 = arith.constant 0 : index
    %c0_0 = arith.constant 0 : index
    %c0_1 = arith.constant 0 : index
    %c0_2 = arith.constant 0 : index
    %0 = vector.load %arg1[%c0, %c0_0, %c0_1, %c0_2] : memref<2x1x8x32xf32, #tpu.memory_space<vmem>>, vector<1x1x8x32xf32>
    %1 = vector.shape_cast %0 : vector<1x1x8x32xf32> to vector<8x32xf32>
    %c1 = arith.constant 1 : index
    %c0_3 = arith.constant 0 : index
    %c0_4 = arith.constant 0 : index
    %c0_5 = arith.constant 0 : index
    %2 = vector.load %arg1[%c1, %c0_3, %c0_4, %c0_5] : memref<2x1x8x32xf32, #tpu.memory_space<vmem>>, vector<1x1x8x32xf32>
    %3 = vector.shape_cast %2 : vector<1x1x8x32xf32> to vector<8x32xf32>
    %c0_6 = arith.constant 0 : index
    %c0_7 = arith.constant 0 : index
    %4 = vector.load %arg2[%c0_6, %c0_7] : memref<32x64xf32, #tpu.memory_space<vmem>>, vector<32x64xf32>
    %cst = arith.constant dense<0.000000e+00> : vector<8x64xf32>
    %5 = tpu.matmul %3, %4, %cst {dimension_numbers = #tpu.dot_dimension_numbers<[1], [0], [0], [1], [0, 0, 1, 1], [], []>} : vector<8x32xf32>, vector<32x64xf32>, vector<8x64xf32> -> vector<8x64xf32>
    %6 = vector.extract_strided_slice %5 {offsets = [0, 0], sizes = [8, 32], strides = [1, 1]} : vector<8x64xf32> to vector<8x32xf32>
    %7 = vector.extract_strided_slice %5 {offsets = [0, 32], sizes = [8, 32], strides = [1, 1]} : vector<8x64xf32> to vector<8x32xf32>
    %cst_8 = arith.constant 5.000000e-01 : f32
    %8 = vector.broadcast %cst_8 : f32 to vector<8x32xf32>
    %9 = arith.mulf %1, %8 : vector<8x32xf32>
    %10 = vector.extract_strided_slice %9 {offsets = [0, 0], sizes = [8, 4], strides = [1, 1]} : vector<8x32xf32> to vector<8x4xf32>
    %11 = vector.extract_strided_slice %6 {offsets = [0, 0], sizes = [8, 4], strides = [1, 1]} : vector<8x32xf32> to vector<8x4xf32>
    %12 = vector.extract_strided_slice %7 {offsets = [0, 0], sizes = [8, 4], strides = [1, 1]} : vector<8x32xf32> to vector<8x4xf32>
    %cst_9 = arith.constant dense<0.000000e+00> : vector<8x8xf32>
    %13 = tpu.matmul %10, %11, %cst_9 {dimension_numbers = #tpu.dot_dimension_numbers<[1], [1], [0], [0], [0, 0, 1, 0], [], []>} : vector<8x4xf32>, vector<8x4xf32>, vector<8x8xf32> -> vector<8x8xf32>
    %cst_10 = arith.constant dense<0xFF800000> : vector<8xf32>
    %14 = vector.multi_reduction <maximumf>, %13, %cst_10 [1] : vector<8x8xf32> to vector<8xf32>
    %15 = vector.shape_cast %14 : vector<8xf32> to vector<8x1xf32>
    %16 = vector.broadcast %15 : vector<8x1xf32> to vector<8x8xf32>
    %17 = arith.subf %13, %16 : vector<8x8xf32>
    %18 = math.exp %17 : vector<8x8xf32>
    %cst_11 = arith.constant dense<0.000000e+00> : vector<8xf32>
    %19 = vector.multi_reduction <add>, %18, %cst_11 [1] : vector<8x8xf32> to vector<8xf32>
    %20 = vector.shape_cast %19 : vector<8xf32> to vector<8x1xf32>
    %21 = tpu.reciprocal %20 {approx = true} : vector<8x1xf32> -> vector<8x1xf32>
    %22 = vector.broadcast %21 : vector<8x1xf32> to vector<8x8xf32>
    %23 = arith.mulf %18, %22 : vector<8x8xf32>
    %cst_12 = arith.constant dense<0.000000e+00> : vector<8x4xf32>
    %24 = tpu.matmul %23, %12, %cst_12 {dimension_numbers = #tpu.dot_dimension_numbers<[1], [0], [0], [1], [0, 0, 1, 1], [], []>} : vector<8x8xf32>, vector<8x4xf32>, vector<8x4xf32> -> vector<8x4xf32>
    %25 = vector.extract_strided_slice %9 {offsets = [0, 4], sizes = [8, 4], strides = [1, 1]} : vector<8x32xf32> to vector<8x4xf32>
    %26 = vector.extract_strided_slice %6 {offsets = [0, 4], sizes = [8, 4], strides = [1, 1]} : vector<8x32xf32> to vector<8x4xf32>
    %27 = vector.extract_strided_slice %7 {offsets = [0, 4], sizes = [8, 4], strides = [1, 1]} : vector<8x32xf32> to vector<8x4xf32>
    %cst_13 = arith.constant dense<0.000000e+00> : vector<8x8xf32>
    %28 = tpu.matmul %25, %26, %cst_13 {dimension_numbers = #tpu.dot_dimension_numbers<[1], [1], [0], [0], [0, 0, 1, 0], [], []>} : vector<8x4xf32>, vector<8x4xf32>, vector<8x8xf32> -> vector<8x8xf32>
    %cst_14 = arith.constant dense<0xFF800000> : vector<8xf32>
    %29 = vector.multi_reduction <maximumf>, %28, %cst_14 [1] : vector<8x8xf32> to vector<8xf32>
    %30 = vector.shape_cast %29 : vector<8xf32> to vector<8x1xf32>
    %31 = vector.broadcast %30 : vector<8x1xf32> to vector<8x8xf32>
    %32 = arith.subf %28, %31 : vector<8x8xf32>
    %33 = math.exp %32 : vector<8x8xf32>
    %cst_15 = arith.constant dense<0.000000e+00> : vector<8xf32>
    %34 = vector.multi_reduction <add>, %33, %cst_15 [1] : vector<8x8xf32> to vector<8xf32>
    %35 = vector.shape_cast %34 : vector<8xf32> to vector<8x1xf32>
    %36 = tpu.reciprocal %35 {approx = true} : vector<8x1xf32> -> vector<8x1xf32>
    %37 = vector.broadcast %36 : vector<8x1xf32> to vector<8x8xf32>
    %38 = arith.mulf %33, %37 : vector<8x8xf32>
    %cst_16 = arith.constant dense<0.000000e+00> : vector<8x4xf32>
    %39 = tpu.matmul %38, %27, %cst_16 {dimension_numbers = #tpu.dot_dimension_numbers<[1], [0], [0], [1], [0, 0, 1, 1], [], []>} : vector<8x8xf32>, vector<8x4xf32>, vector<8x4xf32> -> vector<8x4xf32>
    %40 = vector.extract_strided_slice %9 {offsets = [0, 8], sizes = [8, 4], strides = [1, 1]} : vector<8x32xf32> to vector<8x4xf32>
    %41 = vector.extract_strided_slice %6 {offsets = [0, 8], sizes = [8, 4], strides = [1, 1]} : vector<8x32xf32> to vector<8x4xf32>
    %42 = vector.extract_strided_slice %7 {offsets = [0, 8], sizes = [8, 4], strides = [1, 1]} : vector<8x32xf32> to vector<8x4xf32>
    %cst_17 = arith.constant dense<0.000000e+00> : vector<8x8xf32>
    %43 = tpu.matmul %40, %41, %cst_17 {dimension_numbers = #tpu.dot_dimension_numbers<[1], [1], [0], [0], [0, 0, 1, 0], [], []>} : vector<8x4xf32>, vector<8x4xf32>, vector<8x8xf32> -> vector<8x8xf32>
    %cst_18 = arith.constant dense<0xFF800000> : vector<8xf32>
    %44 = vector.multi_reduction <maximumf>, %43, %cst_18 [1] : vector<8x8xf32> to vector<8xf32>
    %45 = vector.shape_cast %44 : vector<8xf32> to vector<8x1xf32>
    %46 = vector.broadcast %45 : vector<8x1xf32> to vector<8x8xf32>
    %47 = arith.subf %43, %46 : vector<8x8xf32>
    %48 = math.exp %47 : vector<8x8xf32>
    %cst_19 = arith.constant dense<0.000000e+00> : vector<8xf32>
    %49 = vector.multi_reduction <add>, %48, %cst_19 [1] : vector<8x8xf32> to vector<8xf32>
    %50 = vector.shape_cast %49 : vector<8xf32> to vector<8x1xf32>
    %51 = tpu.reciprocal %50 {approx = true} : vector<8x1xf32> -> vector<8x1xf32>
    %52 = vector.broadcast %51 : vector<8x1xf32> to vector<8x8xf32>
    %53 = arith.mulf %48, %52 : vector<8x8xf32>
    %cst_20 = arith.constant dense<0.000000e+00> : vector<8x4xf32>
    %54 = tpu.matmul %53, %42, %cst_20 {dimension_numbers = #tpu.dot_dimension_numbers<[1], [0], [0], [1], [0, 0, 1, 1], [], []>} : vector<8x8xf32>, vector<8x4xf32>, vector<8x4xf32> -> vector<8x4xf32>
    %55 = vector.extract_strided_slice %9 {offsets = [0, 12], sizes = [8, 4], strides = [1, 1]} : vector<8x32xf32> to vector<8x4xf32>
    %56 = vector.extract_strided_slice %6 {offsets = [0, 12], sizes = [8, 4], strides = [1, 1]} : vector<8x32xf32> to vector<8x4xf32>
    %57 = vector.extract_strided_slice %7 {offsets = [0, 12], sizes = [8, 4], strides = [1, 1]} : vector<8x32xf32> to vector<8x4xf32>
    %cst_21 = arith.constant dense<0.000000e+00> : vector<8x8xf32>
    %58 = tpu.matmul %55, %56, %cst_21 {dimension_numbers = #tpu.dot_dimension_numbers<[1], [1], [0], [0], [0, 0, 1, 0], [], []>} : vector<8x4xf32>, vector<8x4xf32>, vector<8x8xf32> -> vector<8x8xf32>
    %cst_22 = arith.constant dense<0xFF800000> : vector<8xf32>
    %59 = vector.multi_reduction <maximumf>, %58, %cst_22 [1] : vector<8x8xf32> to vector<8xf32>
    %60 = vector.shape_cast %59 : vector<8xf32> to vector<8x1xf32>
    %61 = vector.broadcast %60 : vector<8x1xf32> to vector<8x8xf32>
    %62 = arith.subf %58, %61 : vector<8x8xf32>
    %63 = math.exp %62 : vector<8x8xf32>
    %cst_23 = arith.constant dense<0.000000e+00> : vector<8xf32>
    %64 = vector.multi_reduction <add>, %63, %cst_23 [1] : vector<8x8xf32> to vector<8xf32>
    %65 = vector.shape_cast %64 : vector<8xf32> to vector<8x1xf32>
    %66 = tpu.reciprocal %65 {approx = true} : vector<8x1xf32> -> vector<8x1xf32>
    %67 = vector.broadcast %66 : vector<8x1xf32> to vector<8x8xf32>
    %68 = arith.mulf %63, %67 : vector<8x8xf32>
    %cst_24 = arith.constant dense<0.000000e+00> : vector<8x4xf32>
    %69 = tpu.matmul %68, %57, %cst_24 {dimension_numbers = #tpu.dot_dimension_numbers<[1], [0], [0], [1], [0, 0, 1, 1], [], []>} : vector<8x8xf32>, vector<8x4xf32>, vector<8x4xf32> -> vector<8x4xf32>
    %70 = vector.extract_strided_slice %9 {offsets = [0, 16], sizes = [8, 4], strides = [1, 1]} : vector<8x32xf32> to vector<8x4xf32>
    %71 = vector.extract_strided_slice %6 {offsets = [0, 16], sizes = [8, 4], strides = [1, 1]} : vector<8x32xf32> to vector<8x4xf32>
    %72 = vector.extract_strided_slice %7 {offsets = [0, 16], sizes = [8, 4], strides = [1, 1]} : vector<8x32xf32> to vector<8x4xf32>
    %cst_25 = arith.constant dense<0.000000e+00> : vector<8x8xf32>
    %73 = tpu.matmul %70, %71, %cst_25 {dimension_numbers = #tpu.dot_dimension_numbers<[1], [1], [0], [0], [0, 0, 1, 0], [], []>} : vector<8x4xf32>, vector<8x4xf32>, vector<8x8xf32> -> vector<8x8xf32>
    %cst_26 = arith.constant dense<0xFF800000> : vector<8xf32>
    %74 = vector.multi_reduction <maximumf>, %73, %cst_26 [1] : vector<8x8xf32> to vector<8xf32>
    %75 = vector.shape_cast %74 : vector<8xf32> to vector<8x1xf32>
    %76 = vector.broadcast %75 : vector<8x1xf32> to vector<8x8xf32>
    %77 = arith.subf %73, %76 : vector<8x8xf32>
    %78 = math.exp %77 : vector<8x8xf32>
    %cst_27 = arith.constant dense<0.000000e+00> : vector<8xf32>
    %79 = vector.multi_reduction <add>, %78, %cst_27 [1] : vector<8x8xf32> to vector<8xf32>
    %80 = vector.shape_cast %79 : vector<8xf32> to vector<8x1xf32>
    %81 = tpu.reciprocal %80 {approx = true} : vector<8x1xf32> -> vector<8x1xf32>
    %82 = vector.broadcast %81 : vector<8x1xf32> to vector<8x8xf32>
    %83 = arith.mulf %78, %82 : vector<8x8xf32>
    %cst_28 = arith.constant dense<0.000000e+00> : vector<8x4xf32>
    %84 = tpu.matmul %83, %72, %cst_28 {dimension_numbers = #tpu.dot_dimension_numbers<[1], [0], [0], [1], [0, 0, 1, 1], [], []>} : vector<8x8xf32>, vector<8x4xf32>, vector<8x4xf32> -> vector<8x4xf32>
    %85 = vector.extract_strided_slice %9 {offsets = [0, 20], sizes = [8, 4], strides = [1, 1]} : vector<8x32xf32> to vector<8x4xf32>
    %86 = vector.extract_strided_slice %6 {offsets = [0, 20], sizes = [8, 4], strides = [1, 1]} : vector<8x32xf32> to vector<8x4xf32>
    %87 = vector.extract_strided_slice %7 {offsets = [0, 20], sizes = [8, 4], strides = [1, 1]} : vector<8x32xf32> to vector<8x4xf32>
    %cst_29 = arith.constant dense<0.000000e+00> : vector<8x8xf32>
    %88 = tpu.matmul %85, %86, %cst_29 {dimension_numbers = #tpu.dot_dimension_numbers<[1], [1], [0], [0], [0, 0, 1, 0], [], []>} : vector<8x4xf32>, vector<8x4xf32>, vector<8x8xf32> -> vector<8x8xf32>
    %cst_30 = arith.constant dense<0xFF800000> : vector<8xf32>
    %89 = vector.multi_reduction <maximumf>, %88, %cst_30 [1] : vector<8x8xf32> to vector<8xf32>
    %90 = vector.shape_cast %89 : vector<8xf32> to vector<8x1xf32>
    %91 = vector.broadcast %90 : vector<8x1xf32> to vector<8x8xf32>
    %92 = arith.subf %88, %91 : vector<8x8xf32>
    %93 = math.exp %92 : vector<8x8xf32>
    %cst_31 = arith.constant dense<0.000000e+00> : vector<8xf32>
    %94 = vector.multi_reduction <add>, %93, %cst_31 [1] : vector<8x8xf32> to vector<8xf32>
    %95 = vector.shape_cast %94 : vector<8xf32> to vector<8x1xf32>
    %96 = tpu.reciprocal %95 {approx = true} : vector<8x1xf32> -> vector<8x1xf32>
    %97 = vector.broadcast %96 : vector<8x1xf32> to vector<8x8xf32>
    %98 = arith.mulf %93, %97 : vector<8x8xf32>
    %cst_32 = arith.constant dense<0.000000e+00> : vector<8x4xf32>
    %99 = tpu.matmul %98, %87, %cst_32 {dimension_numbers = #tpu.dot_dimension_numbers<[1], [0], [0], [1], [0, 0, 1, 1], [], []>} : vector<8x8xf32>, vector<8x4xf32>, vector<8x4xf32> -> vector<8x4xf32>
    %100 = vector.extract_strided_slice %9 {offsets = [0, 24], sizes = [8, 4], strides = [1, 1]} : vector<8x32xf32> to vector<8x4xf32>
    %101 = vector.extract_strided_slice %6 {offsets = [0, 24], sizes = [8, 4], strides = [1, 1]} : vector<8x32xf32> to vector<8x4xf32>
    %102 = vector.extract_strided_slice %7 {offsets = [0, 24], sizes = [8, 4], strides = [1, 1]} : vector<8x32xf32> to vector<8x4xf32>
    %cst_33 = arith.constant dense<0.000000e+00> : vector<8x8xf32>
    %103 = tpu.matmul %100, %101, %cst_33 {dimension_numbers = #tpu.dot_dimension_numbers<[1], [1], [0], [0], [0, 0, 1, 0], [], []>} : vector<8x4xf32>, vector<8x4xf32>, vector<8x8xf32> -> vector<8x8xf32>
    %cst_34 = arith.constant dense<0xFF800000> : vector<8xf32>
    %104 = vector.multi_reduction <maximumf>, %103, %cst_34 [1] : vector<8x8xf32> to vector<8xf32>
    %105 = vector.shape_cast %104 : vector<8xf32> to vector<8x1xf32>
    %106 = vector.broadcast %105 : vector<8x1xf32> to vector<8x8xf32>
    %107 = arith.subf %103, %106 : vector<8x8xf32>
    %108 = math.exp %107 : vector<8x8xf32>
    %cst_35 = arith.constant dense<0.000000e+00> : vector<8xf32>
    %109 = vector.multi_reduction <add>, %108, %cst_35 [1] : vector<8x8xf32> to vector<8xf32>
    %110 = vector.shape_cast %109 : vector<8xf32> to vector<8x1xf32>
    %111 = tpu.reciprocal %110 {approx = true} : vector<8x1xf32> -> vector<8x1xf32>
    %112 = vector.broadcast %111 : vector<8x1xf32> to vector<8x8xf32>
    %113 = arith.mulf %108, %112 : vector<8x8xf32>
    %cst_36 = arith.constant dense<0.000000e+00> : vector<8x4xf32>
    %114 = tpu.matmul %113, %102, %cst_36 {dimension_numbers = #tpu.dot_dimension_numbers<[1], [0], [0], [1], [0, 0, 1, 1], [], []>} : vector<8x8xf32>, vector<8x4xf32>, vector<8x4xf32> -> vector<8x4xf32>
    %115 = vector.extract_strided_slice %9 {offsets = [0, 28], sizes = [8, 4], strides = [1, 1]} : vector<8x32xf32> to vector<8x4xf32>
    %116 = vector.extract_strided_slice %6 {offsets = [0, 28], sizes = [8, 4], strides = [1, 1]} : vector<8x32xf32> to vector<8x4xf32>
    %117 = vector.extract_strided_slice %7 {offsets = [0, 28], sizes = [8, 4], strides = [1, 1]} : vector<8x32xf32> to vector<8x4xf32>
    %cst_37 = arith.constant dense<0.000000e+00> : vector<8x8xf32>
    %118 = tpu.matmul %115, %116, %cst_37 {dimension_numbers = #tpu.dot_dimension_numbers<[1], [1], [0], [0], [0, 0, 1, 0], [], []>} : vector<8x4xf32>, vector<8x4xf32>, vector<8x8xf32> -> vector<8x8xf32>
    %cst_38 = arith.constant dense<0xFF800000> : vector<8xf32>
    %119 = vector.multi_reduction <maximumf>, %118, %cst_38 [1] : vector<8x8xf32> to vector<8xf32>
    %120 = vector.shape_cast %119 : vector<8xf32> to vector<8x1xf32>
    %121 = vector.broadcast %120 : vector<8x1xf32> to vector<8x8xf32>
    %122 = arith.subf %118, %121 : vector<8x8xf32>
    %123 = math.exp %122 : vector<8x8xf32>
    %cst_39 = arith.constant dense<0.000000e+00> : vector<8xf32>
    %124 = vector.multi_reduction <add>, %123, %cst_39 [1] : vector<8x8xf32> to vector<8xf32>
    %125 = vector.shape_cast %124 : vector<8xf32> to vector<8x1xf32>
    %126 = tpu.reciprocal %125 {approx = true} : vector<8x1xf32> -> vector<8x1xf32>
    %127 = vector.broadcast %126 : vector<8x1xf32> to vector<8x8xf32>
    %128 = arith.mulf %123, %127 : vector<8x8xf32>
    %cst_40 = arith.constant dense<0.000000e+00> : vector<8x4xf32>
    %129 = tpu.matmul %128, %117, %cst_40 {dimension_numbers = #tpu.dot_dimension_numbers<[1], [0], [0], [1], [0, 0, 1, 1], [], []>} : vector<8x8xf32>, vector<8x4xf32>, vector<8x4xf32> -> vector<8x4xf32>
    %130 = tpu.concatenate %24, %39, %54, %69, %84, %99, %114, %129 in 1 : vector<8x4xf32>, vector<8x4xf32>, vector<8x4xf32>, vector<8x4xf32>, vector<8x4xf32>, vector<8x4xf32>, vector<8x4xf32>, vector<8x4xf32> -> vector<8x32xf32>
    %c0_41 = arith.constant 0 : index
    %c0_42 = arith.constant 0 : index
    %131 = vector.load %arg3[%c0_41, %c0_42] : memref<32x32xf32, #tpu.memory_space<vmem>>, vector<32x32xf32>
    %cst_43 = arith.constant dense<0.000000e+00> : vector<8x32xf32>
    %132 = tpu.matmul %130, %131, %cst_43 {dimension_numbers = #tpu.dot_dimension_numbers<[1], [0], [0], [1], [0, 0, 1, 1], [], []>} : vector<8x32xf32>, vector<32x32xf32>, vector<8x32xf32> -> vector<8x32xf32>
    %c0_44 = arith.constant 0 : index
    %c0_45 = arith.constant 0 : index
    %133 = vector.load %arg4[%c0_44, %c0_45] : memref<1x32xf32, #tpu.memory_space<vmem>>, vector<1x32xf32>
    %134 = vector.broadcast %133 : vector<1x32xf32> to vector<8x32xf32>
    %135 = arith.addf %132, %134 : vector<8x32xf32>
    %c0_46 = arith.constant 0 : index
    %c0_47 = arith.constant 0 : index
    %c0_48 = arith.constant 0 : index
    %136 = vector.load %arg5[%c0_46, %c0_47, %c0_48] : memref<1x8x32xf32, #tpu.memory_space<vmem>>, vector<1x8x32xf32>
    %137 = vector.shape_cast %136 : vector<1x8x32xf32> to vector<8x32xf32>
    %138 = vector.shape_cast %135 : vector<8x32xf32> to vector<1x8x32xf32>
    tpu.vector_store %arg5[%c0_46, %c0_47, %c0_48], %138 {strides = array<i32>} : memref<1x8x32xf32, #tpu.memory_space<vmem>>, vector<1x8x32xf32>,
    return
  }
  func.func @transform_0(%arg0: i32) -> (i32, i32, i32, i32) {
    %c0_i32 = arith.constant 0 : i32
    %c0_i32_0 = arith.constant 0 : i32
    %c0_i32_1 = arith.constant 0 : i32
    %c0_i32_2 = arith.constant 0 : i32
    return %c0_i32, %arg0, %c0_i32_0, %c0_i32_1 : i32, i32, i32, i32
  }
  func.func @transform_1(%arg0: i32) -> (i32, i32) {
    %c0_i32 = arith.constant 0 : i32
    %c0_i32_0 = arith.constant 0 : i32
    %c0_i32_1 = arith.constant 0 : i32
    return %c0_i32, %c0_i32_0 : i32, i32
  }
  func.func @transform_2(%arg0: i32) -> (i32, i32) {
    %c0_i32 = arith.constant 0 : i32
    %c0_i32_0 = arith.constant 0 : i32
    %c0_i32_1 = arith.constant 0 : i32
    return %c0_i32, %c0_i32_0 : i32, i32
  }
  func.func @transform_3(%arg0: i32) -> (i32, i32) {
    %c0_i32 = arith.constant 0 : i32
    %c0_i32_0 = arith.constant 0 : i32
    %c0_i32_1 = arith.constant 0 : i32
    return %c0_i32, %c0_i32_0 : i32, i32
  }
  func.func @transform_4(%arg0: i32) -> (i32, i32, i32) {
    %c0_i32 = arith.constant 0 : i32
    %c0_i32_0 = arith.constant 0 : i32
    %c0_i32_1 = arith.constant 0 : i32
    return %arg0, %c0_i32, %c0_i32_0 : i32, i32, i32
  }
}

</mosaic_0001>

<llo_original>
// kernel: cross_attention_forward.1
$region0: #{cross_attention_forward.1}
  #allocation0 [shape = 'u32[]', space=smem, size = 0x4, offset = 0x4, fixed_abs, tag = 'smem constant byte address 0x4 - core index']
  #allocation1 [shape = 'u32[72,128]{1,0:T(1,128)}', space=vmem, size = 0x9000, scoped, tag = 'internal scratch']
  %s0 = inlined_call_operand.hbm [shape: f32[2,2,8,32], index: 0, kind: input, shape index: {}]
  %s1 = inlined_call_operand.hbm [shape: f32[32,64], index: 1, kind: input, shape index: {}]
  %s2 = inlined_call_operand.hbm [shape: f32[32,32], index: 2, kind: input, shape index: {}]
  %s3 = inlined_call_operand.vmem [shape: f32[1,32], index: 3, kind: input, shape index: {}]
  %s4 = inlined_call_operand.hbm [shape: f32[2,8,32], index: 4, kind: output, shape index: {}]
  %s5 = sld [smem:[#allocation0]]
  $region61: #{cross_attention_forward.1} parent=0
    _
  %s7 = ssub.s32 1, %s5
  %s8 = scalar_select 0, %s7, %s5
  $region1: #{cross_attention_forward.1} parent=0
    #allocation2 [shape = 'u8[16384]{0}', space=vmem, size = 0x4000, scoped, tag = 'input window, operand 0']
    #allocation3 [shape = 's32[2]{0}', space=sflag, size = 0x8, scoped, tag = 'scoped memory for cross_attention_forward.1']
    #allocation4 [shape = 's32[2]{0}', space=sflag, size = 0x8, scoped, tag = 'scoped memory for cross_attention_forward.1']
    #allocation5 [shape = 'u8[16384]{0}', space=vmem, size = 0x4000, scoped, tag = 'input window, operand 1, single buffered']
    #allocation6 [shape = 's32[1]{0}', space=sflag, size = 0x4, scoped, tag = 'scoped memory for cross_attention_forward.1']
    #allocation7 [shape = 'u8[16384]{0}', space=vmem, size = 0x4000, scoped, tag = 'input window, operand 2, single buffered']
    #allocation8 [shape = 'u8[8192]{0}', space=vmem, size = 0x2000, scoped, tag = 'output window, operand 0']
    %9 = vsyncpa [#allocation3], 0
    %s10 = scalar_lea.sflag [#allocation3], 1
    %11 = vsyncpa %s10, 0
    %12 = vsyncpa [#allocation6], 0
    %13 = vsyncpa [#allocation4], 0
    %s14 = scalar_lea.sflag [#allocation4], 1
    %15 = vsyncpa %s14, 0
    loop: start=0, step=1, limit=4
    $region2: #{cross_attention_forward.1} parent=1 // loop_pre_header
      _
    $region3: #{cross_attention_forward.1} parent=1 // loop_header
      %s17 = sphi 0, %s21
      %p18 = scmp.ge.s32.totalorder %s17, 4
      %s27 = sphi 0, %s29
      %s30 = sphi 0, %s27
      %s31 = sphi 0, %s30
      %s47 = sphi 0, %s31
      %s51 = sphi 0, %s51
      %s53 = sphi 0, %s51
      %s54 = sphi 0, %s53
      %s68 = sphi 0, %s54
      %s72 = sphi 0, %s72
      %s74 = sphi 0, %s72
      %s75 = sphi 0, %s74
      %s89 = sphi 0, %s75
      %s93 = sphi 0, %s93
      %s95 = sphi 0, %s93
      %s96 = sphi 0, %s95
      %s110 = sphi 0, %s96
      %s116 = sphi 0, %s118
      %s119 = sphi 0, %s116
      %s120 = sphi 0, %s119
      %s136 = sphi 0, %s120
    $region4: #{cross_attention_forward.1} parent=1 // loop_header_branch
      %20 = sbr.rel (%p18) target = $region8
    $region5: #{cross_attention_forward.1} parent=1 // loop_body
      %s22 = ssub.s32 %s17, 1
      %s23 = ssub.s32 %s17, 2
      %s24 = sadd.s32 %s17, 1
      %s25 = ssub.s32 %s17, %s24
      %p26 = scmp.eq.s32.totalorder %s25, 0
      %s28 = sadd.s32 %s27, 1
      %s29 = scalar_select %p26, %s27, %s28
      %p32 = pneg %p26
      %p33 = scmp.eq.s32.totalorder %s17, 1
      %p34 = por %p32, %p33
      %p35 = scmp.ne.s32.totalorder %s27, %s30
      %p36 = scmp.eq.s32.totalorder %s17, 0
      %p37 = por %p35, %p36
      %p38 = scmp.ne.s32.totalorder %s27, %s30
      %p39 = scmp.eq.s32.totalorder %s22, 1
      %p40 = por %p38, %p39
      %p41 = scmp.ne.s32.totalorder %s30, %s31
      %p42 = scmp.eq.s32.totalorder %s22, 0
      %p43 = por %p41, %p42
      %p44 = scmp.ne.s32.totalorder %s30, %s31
      %p45 = scmp.eq.s32.totalorder %s23, 1
      %p46 = por %p44, %p45
      %p48 = scmp.ne.s32.totalorder %s31, %s47
      %p49 = scmp.eq.s32.totalorder %s23, 0
      %p50 = por %p48, %p49
      %s52 = sadd.s32 %s51, 1
      %p55 = scmp.eq.s32.totalorder %s17, 1
      %p56 = scmp.ne.s32.totalorder %s51, %s53
      %p57 = scmp.eq.s32.totalorder %s17, 0
      %p58 = por %p56, %p57
      %p59 = scmp.ne.s32.totalorder %s51, %s53
      %p60 = scmp.eq.s32.totalorder %s22, 1
      %p61 = por %p59, %p60
      %p62 = scmp.ne.s32.totalorder %s53, %s54
      %p63 = scmp.eq.s32.totalorder %s22, 0
      %p64 = por %p62, %p63
      %p65 = scmp.ne.s32.totalorder %s53, %s54
      %p66 = scmp.eq.s32.totalorder %s23, 1
      %p67 = por %p65, %p66
      %p69 = scmp.ne.s32.totalorder %s54, %s68
      %p70 = scmp.eq.s32.totalorder %s23, 0
      %p71 = por %p69, %p70
      %s73 = sadd.s32 %s72, 1
      %p76 = scmp.eq.s32.totalorder %s17, 1
      %p77 = scmp.ne.s32.totalorder %s72, %s74
      %p78 = scmp.eq.s32.totalorder %s17, 0
      %p79 = por %p77, %p78
      %p80 = scmp.ne.s32.totalorder %s72, %s74
      %p81 = scmp.eq.s32.totalorder %s22, 1
      %p82 = por %p80, %p81
      %p83 = scmp.ne.s32.totalorder %s74, %s75
      %p84 = scmp.eq.s32.totalorder %s22, 0
      %p85 = por %p83, %p84
      %p86 = scmp.ne.s32.totalorder %s74, %s75
      %p87 = scmp.eq.s32.totalorder %s23, 1
      %p88 = por %p86, %p87
      %p90 = scmp.ne.s32.totalorder %s75, %s89
      %p91 = scmp.eq.s32.totalorder %s23, 0
      %p92 = por %p90, %p91
      %s94 = sadd.s32 %s93, 1
      %p97 = scmp.eq.s32.totalorder %s17, 1
      %p98 = scmp.ne.s32.totalorder %s93, %s95
      %p99 = scmp.eq.s32.totalorder %s17, 0
      %p100 = por %p98, %p99
      %p101 = scmp.ne.s32.totalorder %s93, %s95
      %p102 = scmp.eq.s32.totalorder %s22, 1
      %p103 = por %p101, %p102
      %p104 = scmp.ne.s32.totalorder %s95, %s96
      %p105 = scmp.eq.s32.totalorder %s22, 0
      %p106 = por %p104, %p105
      %p107 = scmp.ne.s32.totalorder %s95, %s96
      %p108 = scmp.eq.s32.totalorder %s23, 1
      %p109 = por %p107, %p108
      %p111 = scmp.ne.s32.totalorder %s96, %s110
      %p112 = scmp.eq.s32.totalorder %s23, 0
      %p113 = por %p111, %p112
      %s114 = ssub.s32 %s17, %s24
      %p115 = scmp.eq.s32.totalorder %s114, 0
      %s117 = sadd.s32 %s116, 1
      %s118 = scalar_select %p115, %s116, %s117
      %p121 = pneg %p115
      %p122 = scmp.eq.s32.totalorder %s17, 1
      %p123 = por %p121, %p122
      %p124 = scmp.ne.s32.totalorder %s116, %s119
      %p125 = scmp.eq.s32.totalorder %s17, 0
      %p126 = por %p124, %p125
      %p127 = scmp.ne.s32.totalorder %s116, %s119
      %p128 = scmp.eq.s32.totalorder %s22, 1
      %p129 = por %p127, %p128
      %p130 = scmp.ne.s32.totalorder %s119, %s120
      %p131 = scmp.eq.s32.totalorder %s22, 0
      %p132 = por %p130, %p131
      %p133 = scmp.ne.s32.totalorder %s119, %s120
      %p134 = scmp.eq.s32.totalorder %s23, 1
      %p135 = por %p133, %p134
      %p137 = scmp.ne.s32.totalorder %s120, %s136
      %p138 = scmp.eq.s32.totalorder %s23, 0
      %p139 = por %p137, %p138
      %p140 = scmp.le.s32.totalorder 1, %s17
      %p141 = scmp.lt.s32.totalorder %s17, 3
      %p142 = pnand %p140, %p141
      %p143 = pneg %p142
      // Predicated region
      $region9: #{cross_attention_forward.1} parent=5 // pred_check
        _
      $region10: #{cross_attention_forward.1} parent=5 // pred_check_branch
        %145 = sbr.rel (%p142) target = $region12
      $region11: #{cross_attention_forward.1} parent=5 // pred_region
        %s146 = ssub.s32 %s17, 1
        // Predicated region
        $region13: #{cross_attention_forward.1} parent=11 // pred_check
          %p147 = pneg %p64
        $region14: #{cross_attention_forward.1} parent=11 // pred_check_branch
          %149 = sbr.rel (%p147) target = $region16
        $region15: #{cross_attention_forward.1} parent=11 // pred_region
          %151 = vsyncadd [#allocation6], 0
          %s152 = sshll.u32 %s1, 4
          %s153 = int_to_ptr.hbm [resolvable:$true] %s152
          %s154 = sshll.u32 [#allocation5], 4
          %s155 = int_to_ptr.vmem [resolvable:$true] %s154
          %160 = dma.hbm_to_vmem [thread:$0]  %s153, 512, %s155, [#allocation6], 128, 128, 8
        $region16: #{cross_attention_forward.1} parent=11 // pred_fallthru
          _
        // Predicated region
        $region17: #{cross_attention_forward.1} parent=11 // pred_check
          %p161 = pneg %p85
        $region18: #{cross_attention_forward.1} parent=11 // pred_check_branch
          %163 = sbr.rel (%p161) target = $region20
        $region19: #{cross_attention_forward.1} parent=11 // pred_region
          %165 = vsyncadd [#allocation6], 0
          %s166 = sshll.u32 %s2, 4
          %s167 = int_to_ptr.hbm [resolvable:$true] %s166
          %s168 = sshll.u32 [#allocation7], 4
          %s169 = int_to_ptr.vmem [resolvable:$true] %s168
          %174 = dma.hbm_to_vmem [thread:$0]  %s167, 512, %s169, [#allocation6], 128, 128, 8
        $region20: #{cross_attention_forward.1} parent=11 // pred_fallthru
          _
        // Predicated region
        $region21: #{cross_attention_forward.1} parent=11 // pred_check
          %p175 = pneg %p106
        $region22: #{cross_attention_forward.1} parent=11 // pred_check_branch
          %177 = sbr.rel (%p175) target = $region24
        $region23: #{cross_attention_forward.1} parent=11 // pred_region
          _
        $region24: #{cross_attention_forward.1} parent=11 // pred_fallthru
          _
      $region12: #{cross_attention_forward.1} parent=5 // pred_fallthru
        _
      %p178 = scmp.lt.s32.totalorder %s17, 2
      // Predicated region
      $region25: #{cross_attention_forward.1} parent=5 // pred_check
        %p179 = pneg %p178
      $region26: #{cross_attention_forward.1} parent=5 // pred_check_branch
        %181 = sbr.rel (%p179) target = $region28
      $region27: #{cross_attention_forward.1} parent=5 // pred_region
        // Predicated region
        $region29: #{cross_attention_forward.1} parent=27 // pred_check
          %p182 = pneg %p37
        $region30: #{cross_attention_forward.1} parent=27 // pred_check_branch
          %184 = sbr.rel (%p182) target = $region32
        $region31: #{cross_attention_forward.1} parent=27 // pred_region
          %s185 = sand.u32 %s27, 1
          %s186 = scalar_lea.sflag [#allocation3], %s185
          %s187 = sand.u32 %s27, 1
          %s188 = smul.addr %s187, 16
          %s189 = scalar_lea.vmem [#allocation2], %s188
          %191 = vsyncadd %s186, 0
          %s192 = smul.addr %s17, 8
          %s193 = scalar_lea.hbm %s0, %s192
          %s194 = sshll.u32 %s193, 4
          %s195 = int_to_ptr.hbm [resolvable:$true] %s194
          %s196 = sshll.u32 %s189, 4
          %s197 = int_to_ptr.vmem [resolvable:$true] %s196
          %202 = dma.hbm_to_vmem [thread:$0]  %s195, 256, %s197, %s186, 256, 128, 8
        $region32: #{cross_attention_forward.1} parent=27 // pred_fallthru
          _
      $region28: #{cross_attention_forward.1} parent=5 // pred_fallthru
        _
      %p203 = scmp.le.s32.totalorder 1, %s17
      %p204 = scmp.lt.s32.totalorder %s17, 3
      %p205 = pnand %p203, %p204
      %p206 = pneg %p205
      // Predicated region
      $region33: #{cross_attention_forward.1} parent=5 // pred_check
        _
      $region34: #{cross_attention_forward.1} parent=5 // pred_check_branch
        %208 = sbr.rel (%p205) target = $region36
      $region35: #{cross_attention_forward.1} parent=5 // pred_region
        %s209 = ssub.s32 %s17, 1
        %s210 = sand.u32 %s30, 1
        %s211 = scalar_lea.sflag [#allocation3], %s210
        %s212 = sand.u32 %s30, 1
        %s213 = smul.addr %s212, 16
        %s214 = scalar_lea.vmem [#allocation2], %s213
        // Predicated region
        $region37: #{cross_attention_forward.1} parent=35 // pred_check
          %p215 = pneg %p43
        $region38: #{cross_attention_forward.1} parent=35 // pred_check_branch
          %217 = sbr.rel (%p215) target = $region40
        $region39: #{cross_attention_forward.1} parent=35 // pred_region
          %219 = dma.done %s211, 256
        $region40: #{cross_attention_forward.1} parent=35 // pred_fallthru
          _
        // Predicated region
        $region41: #{cross_attention_forward.1} parent=35 // pred_check
          %p220 = pneg %p64
        $region42: #{cross_attention_forward.1} parent=35 // pred_check_branch
          %222 = sbr.rel (%p220) target = $region44
        $region43: #{cross_attention_forward.1} parent=35 // pred_region
          %224 = dma.done [#allocation6], 512
        $region44: #{cross_attention_forward.1} parent=35 // pred_fallthru
          _
        // Predicated region
        $region45: #{cross_attention_forward.1} parent=35 // pred_check
          %p225 = pneg %p85
        $region46: #{cross_attention_forward.1} parent=35 // pred_check_branch
          %227 = sbr.rel (%p225) target = $region48
        $region47: #{cross_attention_forward.1} parent=35 // pred_region
          %229 = dma.done [#allocation6], 512
        $region48: #{cross_attention_forward.1} parent=35 // pred_fallthru
          _
        %s230 = sand.u32 %s30, 1
        %s231 = scalar_lea.sflag [#allocation3], %s230
        %s232 = sand.u32 %s30, 1
        %s233 = smul.addr %s232, 16
        %s234 = scalar_lea.vmem [#allocation2], %s233
        %p235 = pneg %p43
        %p236 = pneg %p40
        %p237 = pneg %p64
        %p238 = pneg %p61
        %p239 = pneg %p85
        %p240 = pneg %p82
        %p241 = pneg %p106
        %p242 = pneg %p103
        %p243 = pneg %p132
        %p244 = pneg %p129
        %s245 = sand.u32 %s119, 1
        %s246 = scalar_lea.sflag [#allocation4], %s245
        %s247 = sand.u32 %s119, 1
        %s248 = smul.addr %s247, 8
        %s249 = scalar_lea.vmem [#allocation8], %s248
        %v250 = vld [vmem:[%s214] sm:$0xff]
        %s251 = scalar_lea.vmem %s214, 8 [#allocation2]
        %v252 = vld [vmem:[%s251] sm:$0xff]
        %v253 = vld [vmem:[#allocation5] sm:$0xff]
        %v254 = vld [vmem:[#allocation5 + $0x8] sm:$0xff]
        %v255 = vld [vmem:[#allocation5 + $0x10] sm:$0xff]
        %v256 = vld [vmem:[#allocation5 + $0x18] sm:$0xff]
        %vm257 = vcmask 261120
        %v259 = vsel %vm257, %v252, 0
        %261 = vmatpush.msra.mxu0 0.0
        %262 = vmatpush.msra.mxu0 0.0
        %263 = vmatpush.msra.mxu0 0.0
        %264 = vmatpush.msra.mxu0 0.0
        %265 = vmatpush.msra.mxu0 0.0
        %266 = vmatpush.msra.mxu0 0.0
        %267 = vmatpush.msra.mxu0 0.0
        %268 = vmatpush.msra.mxu0 0.0
        %269 = vmatpush.msra.mxu0 0.0
        %270 = vmatpush.msra.mxu0 0.0
        %271 = vmatpush.msra.mxu0 0.0
        %272 = vmatpush.msra.mxu0 0.0
        %273 = vmatpush.msra.mxu0 %v256
        %274 = vmatpush.msra.mxu0 %v255
        %275 = vmatpush.msra.mxu0 %v254
        %276 = vmatpush.msra.mxu0 %v253
        %277 = vmatmul.f32.gmra.mxu0 %v259
        %v278 = vpop.f32.mrf.mxu0
        %v279 = vadd.f32 0.0, %v278
        %280 = vdwg.mxu0
        %v281 = vmul.f32 %v250, 0.5
        %vm282 = vcmask 31744
        %v284 = vsel %vm282, %v281, 0
        %v287 = vsel %vm282, %v279, 0
        %289 = vmatpush.xpose.msra.mxu0 0.0
        %290 = vmatpush.xpose.msra.mxu0 0.0
        %291 = vmatpush.xpose.msra.mxu0 0.0
        %292 = vmatpush.xpose.msra.mxu0 0.0
        %293 = vmatpush.xpose.msra.mxu0 0.0
        %294 = vmatpush.xpose.msra.mxu0 0.0
        %295 = vmatpush.xpose.msra.mxu0 0.0
        %296 = vmatpush.xpose.msra.mxu0 0.0
        %297 = vmatpush.xpose.msra.mxu0 0.0
        %298 = vmatpush.xpose.msra.mxu0 0.0
        %299 = vmatpush.xpose.msra.mxu0 0.0
        %300 = vmatpush.xpose.msra.mxu0 0.0
        %301 = vmatpush.xpose.msra.mxu0 0.0
        %302 = vmatpush.xpose.msra.mxu0 0.0
        %303 = vmatpush.xpose.msra.mxu0 0.0
        %304 = vmatpush.xpose.msra.mxu0 %v287
        %305 = vmatmul.f32.gmra.mxu0 %v284
        %v306 = vpop.f32.mrf.mxu0
        %v307 = vadd.f32 0.0, %v306
        %308 = vdwg.mxu0
        %vm309 = vcmask 64512
        %v310 = vsel %vm309, %v307, -inf
        %311 = vmax.xlane.f32.xlu0 %v310
        %v312 = vpop.xlane.xlu0 %311
        %v313 = vsub.f32 %v307, %v312
        %v314 = vmul.f32 %v313, 1.442695
        %v315 = vpow.pop %v314
        %v316 = vsel %vm309, %v315, 0.0
        %317 = vadd.xlane.f32.xlu0 %v316
        %v318 = vpop.xlane.xlu0 %317
        %v319 = vrcp.pop %v318
        %v320 = vmul.f32 %v315, %v319
        %321 = vrot.lane.b32.xlu0 %v279, 96
        %v322 = vpop.permute.xlu0 %321
        %v325 = vsel %vm309, %v320, 0
        %327 = vmatpush.msra.mxu0 0.0
        %328 = vmatpush.msra.mxu0 0.0
        %329 = vmatpush.msra.mxu0 0.0
        %330 = vmatpush.msra.mxu0 0.0
        %331 = vmatpush.msra.mxu0 0.0
        %332 = vmatpush.msra.mxu0 0.0
        %333 = vmatpush.msra.mxu0 0.0
        %334 = vmatpush.msra.mxu0 0.0
        %335 = vmatpush.msra.mxu0 0.0
        %336 = vmatpush.msra.mxu0 0.0
        %337 = vmatpush.msra.mxu0 0.0
        %338 = vmatpush.msra.mxu0 0.0
        %339 = vmatpush.msra.mxu0 0.0
        %340 = vmatpush.msra.mxu0 0.0
        %341 = vmatpush.msra.mxu0 0.0
        %342 = vmatpush.msra.mxu0 %v322
        %343 = vmatmul.f32.gmra.mxu0 %v325
        %v344 = vpop.f32.mrf.mxu0
        %v345 = vadd.f32 0.0, %v344
        %346 = vdwg.mxu0
        %347 = vrot.lane.b32.xlu0 %v281, 124
        %v348 = vpop.permute.xlu0 %347
        %349 = vrot.lane.b32.xlu0 %v279, 124
        %v350 = vpop.permute.xlu0 %349
        %v351 = vsel %vm282, %v348, 0
        %v353 = vsel %vm282, %v350, 0
        %355 = vmatpush.xpose.msra.mxu0 0.0
        %356 = vmatpush.xpose.msra.mxu0 0.0
        %357 = vmatpush.xpose.msra.mxu0 0.0
        %358 = vmatpush.xpose.msra.mxu0 0.0
        %359 = vmatpush.xpose.msra.mxu0 0.0
        %360 = vmatpush.xpose.msra.mxu0 0.0
        %361 = vmatpush.xpose.msra.mxu0 0.0
        %362 = vmatpush.xpose.msra.mxu0 0.0
        %363 = vmatpush.xpose.msra.mxu0 0.0
        %364 = vmatpush.xpose.msra.mxu0 0.0
        %365 = vmatpush.xpose.msra.mxu0 0.0
        %366 = vmatpush.xpose.msra.mxu0 0.0
        %367 = vmatpush.xpose.msra.mxu0 0.0
        %368 = vmatpush.xpose.msra.mxu0 0.0
        %369 = vmatpush.xpose.msra.mxu0 0.0
        %370 = vmatpush.xpose.msra.mxu0 %v353
        %371 = vmatmul.f32.gmra.mxu0 %v351
        %v372 = vpop.f32.mrf.mxu0
        %v373 = vadd.f32 0.0, %v372
        %374 = vdwg.mxu0
        %v375 = vsel %vm309, %v373, -inf
        %376 = vmax.xlane.f32.xlu0 %v375
        %v377 = vpop.xlane.xlu0 %376
        %v378 = vsub.f32 %v373, %v377
        %v379 = vmul.f32 %v378, 1.442695
        %v380 = vpow.pop %v379
        %v381 = vsel %vm309, %v380, 0.0
        %382 = vadd.xlane.f32.xlu0 %v381
        %v383 = vpop.xlane.xlu0 %382
        %v384 = vrcp.pop %v383
        %v385 = vmul.f32 %v380, %v384
        %386 = vrot.lane.b32.xlu0 %v279, 92
        %v387 = vpop.permute.xlu0 %386
        %v390 = vsel %vm309, %v385, 0
        %392 = vmatpush.msra.mxu0 0.0
        %393 = vmatpush.msra.mxu0 0.0
        %394 = vmatpush.msra.mxu0 0.0
        %395 = vmatpush.msra.mxu0 0.0
        %396 = vmatpush.msra.mxu0 0.0
        %397 = vmatpush.msra.mxu0 0.0
        %398 = vmatpush.msra.mxu0 0.0
        %399 = vmatpush.msra.mxu0 0.0
        %400 = vmatpush.msra.mxu0 0.0
        %401 = vmatpush.msra.mxu0 0.0
        %402 = vmatpush.msra.mxu0 0.0
        %403 = vmatpush.msra.mxu0 0.0
        %404 = vmatpush.msra.mxu0 0.0
        %405 = vmatpush.msra.mxu0 0.0
        %406 = vmatpush.msra.mxu0 0.0
        %407 = vmatpush.msra.mxu0 %v387
        %408 = vmatmul.f32.gmra.mxu0 %v390
        %v409 = vpop.f32.mrf.mxu0
        %v410 = vadd.f32 0.0, %v409
        %411 = vdwg.mxu0
        %412 = vrot.lane.b32.xlu0 %v281, 120
        %v413 = vpop.permute.xlu0 %412
        %414 = vrot.lane.b32.xlu0 %v279, 120
        %v415 = vpop.permute.xlu0 %414
        %v416 = vsel %vm282, %v413, 0
        %v418 = vsel %vm282, %v415, 0
        %420 = vmatpush.xpose.msra.mxu0 0.0
        %421 = vmatpush.xpose.msra.mxu0 0.0
        %422 = vmatpush.xpose.msra.mxu0 0.0
        %423 = vmatpush.xpose.msra.mxu0 0.0
        %424 = vmatpush.xpose.msra.mxu0 0.0
        %425 = vmatpush.xpose.msra.mxu0 0.0
        %426 = vmatpush.xpose.msra.mxu0 0.0
        %427 = vmatpush.xpose.msra.mxu0 0.0
        %428 = vmatpush.xpose.msra.mxu0 0.0
        %429 = vmatpush.xpose.msra.mxu0 0.0
        %430 = vmatpush.xpose.msra.mxu0 0.0
        %431 = vmatpush.xpose.msra.mxu0 0.0
        %432 = vmatpush.xpose.msra.mxu0 0.0
        %433 = vmatpush.xpose.msra.mxu0 0.0
        %434 = vmatpush.xpose.msra.mxu0 0.0
        %435 = vmatpush.xpose.msra.mxu0 %v418
        %436 = vmatmul.f32.gmra.mxu0 %v416
        %v437 = vpop.f32.mrf.mxu0
        %v438 = vadd.f32 0.0, %v437
        %439 = vdwg.mxu0
        %v440 = vsel %vm309, %v438, -inf
        %441 = vmax.xlane.f32.xlu0 %v440
        %v442 = vpop.xlane.xlu0 %441
        %v443 = vsub.f32 %v438, %v442
        %v444 = vmul.f32 %v443, 1.442695
        %v445 = vpow.pop %v444
        %v446 = vsel %vm309, %v445, 0.0
        %447 = vadd.xlane.f32.xlu0 %v446
        %v448 = vpop.xlane.xlu0 %447
        %v449 = vrcp.pop %v448
        %v450 = vmul.f32 %v445, %v449
        %451 = vrot.lane.b32.xlu0 %v279, 88
        %v452 = vpop.permute.xlu0 %451
        %v455 = vsel %vm309, %v450, 0
        %457 = vmatpush.msra.mxu0 0.0
        %458 = vmatpush.msra.mxu0 0.0
        %459 = vmatpush.msra.mxu0 0.0
        %460 = vmatpush.msra.mxu0 0.0
        %461 = vmatpush.msra.mxu0 0.0
        %462 = vmatpush.msra.mxu0 0.0
        %463 = vmatpush.msra.mxu0 0.0
        %464 = vmatpush.msra.mxu0 0.0
        %465 = vmatpush.msra.mxu0 0.0
        %466 = vmatpush.msra.mxu0 0.0
        %467 = vmatpush.msra.mxu0 0.0
        %468 = vmatpush.msra.mxu0 0.0
        %469 = vmatpush.msra.mxu0 0.0
        %470 = vmatpush.msra.mxu0 0.0
        %471 = vmatpush.msra.mxu0 0.0
        %472 = vmatpush.msra.mxu0 %v452
        %473 = vmatmul.f32.gmra.mxu0 %v455
        %v474 = vpop.f32.mrf.mxu0
        %v475 = vadd.f32 0.0, %v474
        %476 = vdwg.mxu0
        %477 = vrot.lane.b32.xlu0 %v281, 116
        %v478 = vpop.permute.xlu0 %477
        %479 = vrot.lane.b32.xlu0 %v279, 116
        %v480 = vpop.permute.xlu0 %479
        %v481 = vsel %vm282, %v478, 0
        %v483 = vsel %vm282, %v480, 0
        %485 = vmatpush.xpose.msra.mxu0 0.0
        %486 = vmatpush.xpose.msra.mxu0 0.0
        %487 = vmatpush.xpose.msra.mxu0 0.0
        %488 = vmatpush.xpose.msra.mxu0 0.0
        %489 = vmatpush.xpose.msra.mxu0 0.0
        %490 = vmatpush.xpose.msra.mxu0 0.0
        %491 = vmatpush.xpose.msra.mxu0 0.0
        %492 = vmatpush.xpose.msra.mxu0 0.0
        %493 = vmatpush.xpose.msra.mxu0 0.0
        %494 = vmatpush.xpose.msra.mxu0 0.0
        %495 = vmatpush.xpose.msra.mxu0 0.0
        %496 = vmatpush.xpose.msra.mxu0 0.0
        %497 = vmatpush.xpose.msra.mxu0 0.0
        %498 = vmatpush.xpose.msra.mxu0 0.0
        %499 = vmatpush.xpose.msra.mxu0 0.0
        %500 = vmatpush.xpose.msra.mxu0 %v483
        %501 = vmatmul.f32.gmra.mxu0 %v481
        %v502 = vpop.f32.mrf.mxu0
        %v503 = vadd.f32 0.0, %v502
        %504 = vdwg.mxu0
        %v505 = vsel %vm309, %v503, -inf
        %506 = vmax.xlane.f32.xlu0 %v505
        %v507 = vpop.xlane.xlu0 %506
        %v508 = vsub.f32 %v503, %v507
        %v509 = vmul.f32 %v508, 1.442695
        %v510 = vpow.pop %v509
        %v511 = vsel %vm309, %v510, 0.0
        %512 = vadd.xlane.f32.xlu0 %v511
        %v513 = vpop.xlane.xlu0 %512
        %v514 = vrcp.pop %v513
        %v515 = vmul.f32 %v510, %v514
        %516 = vrot.lane.b32.xlu0 %v279, 84
        %v517 = vpop.permute.xlu0 %516
        %v520 = vsel %vm309, %v515, 0
        %522 = vmatpush.msra.mxu0 0.0
        %523 = vmatpush.msra.mxu0 0.0
        %524 = vmatpush.msra.mxu0 0.0
        %525 = vmatpush.msra.mxu0 0.0
        %526 = vmatpush.msra.mxu0 0.0
        %527 = vmatpush.msra.mxu0 0.0
        %528 = vmatpush.msra.mxu0 0.0
        %529 = vmatpush.msra.mxu0 0.0
        %530 = vmatpush.msra.mxu0 0.0
        %531 = vmatpush.msra.mxu0 0.0
        %532 = vmatpush.msra.mxu0 0.0
        %533 = vmatpush.msra.mxu0 0.0
        %534 = vmatpush.msra.mxu0 0.0
        %535 = vmatpush.msra.mxu0 0.0
        %536 = vmatpush.msra.mxu0 0.0
        %537 = vmatpush.msra.mxu0 %v517
        %538 = vmatmul.f32.gmra.mxu0 %v520
        %v539 = vpop.f32.mrf.mxu0
        %v540 = vadd.f32 0.0, %v539
        %541 = vdwg.mxu0
        %542 = vrot.lane.b32.xlu0 %v281, 112
        %v543 = vpop.permute.xlu0 %542
        %544 = vrot.lane.b32.xlu0 %v279, 112
        %v545 = vpop.permute.xlu0 %544
        %v546 = vsel %vm282, %v543, 0
        %v548 = vsel %vm282, %v545, 0
        %550 = vmatpush.xpose.msra.mxu0 0.0
        %551 = vmatpush.xpose.msra.mxu0 0.0
        %552 = vmatpush.xpose.msra.mxu0 0.0
        %553 = vmatpush.xpose.msra.mxu0 0.0
        %554 = vmatpush.xpose.msra.mxu0 0.0
        %555 = vmatpush.xpose.msra.mxu0 0.0
        %556 = vmatpush.xpose.msra.mxu0 0.0
        %557 = vmatpush.xpose.msra.mxu0 0.0
        %558 = vmatpush.xpose.msra.mxu0 0.0
        %559 = vmatpush.xpose.msra.mxu0 0.0
        %560 = vmatpush.xpose.msra.mxu0 0.0
        %561 = vmatpush.xpose.msra.mxu0 0.0
        %562 = vmatpush.xpose.msra.mxu0 0.0
        %563 = vmatpush.xpose.msra.mxu0 0.0
        %564 = vmatpush.xpose.msra.mxu0 0.0
        %565 = vmatpush.xpose.msra.mxu0 %v548
        %566 = vmatmul.f32.gmra.mxu0 %v546
        %v567 = vpop.f32.mrf.mxu0
        %v568 = vadd.f32 0.0, %v567
        %569 = vdwg.mxu0
        %v570 = vsel %vm309, %v568, -inf
        %571 = vmax.xlane.f32.xlu0 %v570
        %v572 = vpop.xlane.xlu0 %571
        %v573 = vsub.f32 %v568, %v572
        %v574 = vmul.f32 %v573, 1.442695
        %v575 = vpow.pop %v574
        %v576 = vsel %vm309, %v575, 0.0
        %577 = vadd.xlane.f32.xlu0 %v576
        %v578 = vpop.xlane.xlu0 %577
        %v579 = vrcp.pop %v578
        %v580 = vmul.f32 %v575, %v579
        %581 = vrot.lane.b32.xlu0 %v279, 80
        %v582 = vpop.permute.xlu0 %581
        %v585 = vsel %vm309, %v580, 0
        %587 = vmatpush.msra.mxu0 0.0
        %588 = vmatpush.msra.mxu0 0.0
        %589 = vmatpush.msra.mxu0 0.0
        %590 = vmatpush.msra.mxu0 0.0
        %591 = vmatpush.msra.mxu0 0.0
        %592 = vmatpush.msra.mxu0 0.0
        %593 = vmatpush.msra.mxu0 0.0
        %594 = vmatpush.msra.mxu0 0.0
        %595 = vmatpush.msra.mxu0 0.0
        %596 = vmatpush.msra.mxu0 0.0
        %597 = vmatpush.msra.mxu0 0.0
        %598 = vmatpush.msra.mxu0 0.0
        %599 = vmatpush.msra.mxu0 0.0
        %600 = vmatpush.msra.mxu0 0.0
        %601 = vmatpush.msra.mxu0 0.0
        %602 = vmatpush.msra.mxu0 %v582
        %603 = vmatmul.f32.gmra.mxu0 %v585
        %v604 = vpop.f32.mrf.mxu0
        %v605 = vadd.f32 0.0, %v604
        %606 = vdwg.mxu0
        %607 = vrot.lane.b32.xlu0 %v281, 108
        %v608 = vpop.permute.xlu0 %607
        %609 = vrot.lane.b32.xlu0 %v279, 108
        %v610 = vpop.permute.xlu0 %609
        %v611 = vsel %vm282, %v608, 0
        %v613 = vsel %vm282, %v610, 0
        %615 = vmatpush.xpose.msra.mxu0 0.0
        %616 = vmatpush.xpose.msra.mxu0 0.0
        %617 = vmatpush.xpose.msra.mxu0 0.0
        %618 = vmatpush.xpose.msra.mxu0 0.0
        %619 = vmatpush.xpose.msra.mxu0 0.0
        %620 = vmatpush.xpose.msra.mxu0 0.0
        %621 = vmatpush.xpose.msra.mxu0 0.0
        %622 = vmatpush.xpose.msra.mxu0 0.0
        %623 = vmatpush.xpose.msra.mxu0 0.0
        %624 = vmatpush.xpose.msra.mxu0 0.0
        %625 = vmatpush.xpose.msra.mxu0 0.0
        %626 = vmatpush.xpose.msra.mxu0 0.0
        %627 = vmatpush.xpose.msra.mxu0 0.0
        %628 = vmatpush.xpose.msra.mxu0 0.0
        %629 = vmatpush.xpose.msra.mxu0 0.0
        %630 = vmatpush.xpose.msra.mxu0 %v613
        %631 = vmatmul.f32.gmra.mxu0 %v611
        %v632 = vpop.f32.mrf.mxu0
        %v633 = vadd.f32 0.0, %v632
        %634 = vdwg.mxu0
        %v635 = vsel %vm309, %v633, -inf
        %636 = vmax.xlane.f32.xlu0 %v635
        %v637 = vpop.xlane.xlu0 %636
        %v638 = vsub.f32 %v633, %v637
        %v639 = vmul.f32 %v638, 1.442695
        %v640 = vpow.pop %v639
        %v641 = vsel %vm309, %v640, 0.0
        %642 = vadd.xlane.f32.xlu0 %v641
        %v643 = vpop.xlane.xlu0 %642
        %v644 = vrcp.pop %v643
        %v645 = vmul.f32 %v640, %v644
        %646 = vrot.lane.b32.xlu0 %v279, 76
        %v647 = vpop.permute.xlu0 %646
        %v650 = vsel %vm309, %v645, 0
        %652 = vmatpush.msra.mxu0 0.0
        %653 = vmatpush.msra.mxu0 0.0
        %654 = vmatpush.msra.mxu0 0.0
        %655 = vmatpush.msra.mxu0 0.0
        %656 = vmatpush.msra.mxu0 0.0
        %657 = vmatpush.msra.mxu0 0.0
        %658 = vmatpush.msra.mxu0 0.0
        %659 = vmatpush.msra.mxu0 0.0
        %660 = vmatpush.msra.mxu0 0.0
        %661 = vmatpush.msra.mxu0 0.0
        %662 = vmatpush.msra.mxu0 0.0
        %663 = vmatpush.msra.mxu0 0.0
        %664 = vmatpush.msra.mxu0 0.0
        %665 = vmatpush.msra.mxu0 0.0
        %666 = vmatpush.msra.mxu0 0.0
        %667 = vmatpush.msra.mxu0 %v647
        %668 = vmatmul.f32.gmra.mxu0 %v650
        %v669 = vpop.f32.mrf.mxu0
        %v670 = vadd.f32 0.0, %v669
        %671 = vdwg.mxu0
        %672 = vrot.lane.b32.xlu0 %v281, 104
        %v673 = vpop.permute.xlu0 %672
        %674 = vrot.lane.b32.xlu0 %v279, 104
        %v675 = vpop.permute.xlu0 %674
        %v676 = vsel %vm282, %v673, 0
        %v678 = vsel %vm282, %v675, 0
        %680 = vmatpush.xpose.msra.mxu0 0.0
        %681 = vmatpush.xpose.msra.mxu0 0.0
        %682 = vmatpush.xpose.msra.mxu0 0.0
        %683 = vmatpush.xpose.msra.mxu0 0.0
        %684 = vmatpush.xpose.msra.mxu0 0.0
        %685 = vmatpush.xpose.msra.mxu0 0.0
        %686 = vmatpush.xpose.msra.mxu0 0.0
        %687 = vmatpush.xpose.msra.mxu0 0.0
        %688 = vmatpush.xpose.msra.mxu0 0.0
        %689 = vmatpush.xpose.msra.mxu0 0.0
        %690 = vmatpush.xpose.msra.mxu0 0.0
        %691 = vmatpush.xpose.msra.mxu0 0.0
        %692 = vmatpush.xpose.msra.mxu0 0.0
        %693 = vmatpush.xpose.msra.mxu0 0.0
        %694 = vmatpush.xpose.msra.mxu0 0.0
        %695 = vmatpush.xpose.msra.mxu0 %v678
        %696 = vmatmul.f32.gmra.mxu0 %v676
        %v697 = vpop.f32.mrf.mxu0
        %v698 = vadd.f32 0.0, %v697
        %699 = vdwg.mxu0
        %v700 = vsel %vm309, %v698, -inf
        %701 = vmax.xlane.f32.xlu0 %v700
        %v702 = vpop.xlane.xlu0 %701
        %v703 = vsub.f32 %v698, %v702
        %v704 = vmul.f32 %v703, 1.442695
        %v705 = vpow.pop %v704
        %v706 = vsel %vm309, %v705, 0.0
        %707 = vadd.xlane.f32.xlu0 %v706
        %v708 = vpop.xlane.xlu0 %707
        %v709 = vrcp.pop %v708
        %v710 = vmul.f32 %v705, %v709
        %711 = vrot.lane.b32.xlu0 %v279, 72
        %v712 = vpop.permute.xlu0 %711
        %v715 = vsel %vm309, %v710, 0
        %717 = vmatpush.msra.mxu0 0.0
        %718 = vmatpush.msra.mxu0 0.0
        %719 = vmatpush.msra.mxu0 0.0
        %720 = vmatpush.msra.mxu0 0.0
        %721 = vmatpush.msra.mxu0 0.0
        %722 = vmatpush.msra.mxu0 0.0
        %723 = vmatpush.msra.mxu0 0.0
        %724 = vmatpush.msra.mxu0 0.0
        %725 = vmatpush.msra.mxu0 0.0
        %726 = vmatpush.msra.mxu0 0.0
        %727 = vmatpush.msra.mxu0 0.0
        %728 = vmatpush.msra.mxu0 0.0
        %729 = vmatpush.msra.mxu0 0.0
        %730 = vmatpush.msra.mxu0 0.0
        %731 = vmatpush.msra.mxu0 0.0
        %732 = vmatpush.msra.mxu0 %v712
        %733 = vmatmul.f32.gmra.mxu0 %v715
        %v734 = vpop.f32.mrf.mxu0
        %v735 = vadd.f32 0.0, %v734
        %736 = vdwg.mxu0
        %737 = vrot.lane.b32.xlu0 %v281, 100
        %v738 = vpop.permute.xlu0 %737
        %739 = vrot.lane.b32.xlu0 %v279, 100
        %v740 = vpop.permute.xlu0 %739
        %v741 = vsel %vm282, %v738, 0
        %v743 = vsel %vm282, %v740, 0
        %745 = vmatpush.xpose.msra.mxu0 0.0
        %746 = vmatpush.xpose.msra.mxu0 0.0
        %747 = vmatpush.xpose.msra.mxu0 0.0
        %748 = vmatpush.xpose.msra.mxu0 0.0
        %749 = vmatpush.xpose.msra.mxu0 0.0
        %750 = vmatpush.xpose.msra.mxu0 0.0
        %751 = vmatpush.xpose.msra.mxu0 0.0
        %752 = vmatpush.xpose.msra.mxu0 0.0
        %753 = vmatpush.xpose.msra.mxu0 0.0
        %754 = vmatpush.xpose.msra.mxu0 0.0
        %755 = vmatpush.xpose.msra.mxu0 0.0
        %756 = vmatpush.xpose.msra.mxu0 0.0
        %757 = vmatpush.xpose.msra.mxu0 0.0
        %758 = vmatpush.xpose.msra.mxu0 0.0
        %759 = vmatpush.xpose.msra.mxu0 0.0
        %760 = vmatpush.xpose.msra.mxu0 %v743
        %761 = vmatmul.f32.gmra.mxu0 %v741
        %v762 = vpop.f32.mrf.mxu0
        %v763 = vadd.f32 0.0, %v762
        %764 = vdwg.mxu0
        %v765 = vsel %vm309, %v763, -inf
        %766 = vmax.xlane.f32.xlu0 %v765
        %v767 = vpop.xlane.xlu0 %766
        %v768 = vsub.f32 %v763, %v767
        %v769 = vmul.f32 %v768, 1.442695
        %v770 = vpow.pop %v769
        %v771 = vsel %vm309, %v770, 0.0
        %772 = vadd.xlane.f32.xlu0 %v771
        %v773 = vpop.xlane.xlu0 %772
        %v774 = vrcp.pop %v773
        %v775 = vmul.f32 %v770, %v774
        %776 = vrot.lane.b32.xlu0 %v279, 68
        %v777 = vpop.permute.xlu0 %776
        %v780 = vsel %vm309, %v775, 0
        %782 = vmatpush.msra.mxu0 0.0
        %783 = vmatpush.msra.mxu0 0.0
        %784 = vmatpush.msra.mxu0 0.0
        %785 = vmatpush.msra.mxu0 0.0
        %786 = vmatpush.msra.mxu0 0.0
        %787 = vmatpush.msra.mxu0 0.0
        %788 = vmatpush.msra.mxu0 0.0
        %789 = vmatpush.msra.mxu0 0.0
        %790 = vmatpush.msra.mxu0 0.0
        %791 = vmatpush.msra.mxu0 0.0
        %792 = vmatpush.msra.mxu0 0.0
        %793 = vmatpush.msra.mxu0 0.0
        %794 = vmatpush.msra.mxu0 0.0
        %795 = vmatpush.msra.mxu0 0.0
        %796 = vmatpush.msra.mxu0 0.0
        %797 = vmatpush.msra.mxu0 %v777
        %798 = vmatmul.f32.gmra.mxu0 %v780
        %v799 = vpop.f32.mrf.mxu0
        %v800 = vadd.f32 0.0, %v799
        %801 = vdwg.mxu0
        %803 = vrot.lane.b32.xlu0 %v410, 4
        %v804 = vpop.permute.xlu0 %803
        %807 = vrot.lane.b32.xlu0 %v475, 8
        %v808 = vpop.permute.xlu0 %807
        %811 = vrot.lane.b32.xlu0 %v540, 12
        %v812 = vpop.permute.xlu0 %811
        %815 = vrot.lane.b32.xlu0 %v605, 16
        %v816 = vpop.permute.xlu0 %815
        %819 = vrot.lane.b32.xlu0 %v670, 20
        %v820 = vpop.permute.xlu0 %819
        %823 = vrot.lane.b32.xlu0 %v735, 24
        %v824 = vpop.permute.xlu0 %823
        %827 = vrot.lane.b32.xlu0 %v800, 28
        %v828 = vpop.permute.xlu0 %827
        %v830 = vsel %vm282, %v345, %v804
        %v831 = vsel %vm309, %v830, %v808
        %vm832 = vcmask 97280
        %v833 = vsel %vm832, %v831, %v812
        %vm834 = vcmask 130048
        %v835 = vsel %vm834, %v833, %v816
        %vm836 = vcmask 162816
        %v837 = vsel %vm836, %v835, %v820
        %vm838 = vcmask 195584
        %v839 = vsel %vm838, %v837, %v824
        %vm840 = vcmask 228352
        %v841 = vsel %vm840, %v839, %v828
        %v842 = vld [vmem:[#allocation7] sm:$0xff]
        %v843 = vld [vmem:[#allocation7 + $0x8] sm:$0xff]
        %v844 = vld [vmem:[#allocation7 + $0x10] sm:$0xff]
        %v845 = vld [vmem:[#allocation7 + $0x18] sm:$0xff]
        %v846 = vld [vmem:[%s3] sm:$0x1]
        %v848 = vperm.slane %v846, 0
        %v851 = vsel %vm257, %v841, 0
        %853 = vmatpush.msra.mxu0 0.0
        %854 = vmatpush.msra.mxu0 0.0
        %855 = vmatpush.msra.mxu0 0.0
        %856 = vmatpush.msra.mxu0 0.0
        %857 = vmatpush.msra.mxu0 0.0
        %858 = vmatpush.msra.mxu0 0.0
        %859 = vmatpush.msra.mxu0 0.0
        %860 = vmatpush.msra.mxu0 0.0
        %861 = vmatpush.msra.mxu0 0.0
        %862 = vmatpush.msra.mxu0 0.0
        %863 = vmatpush.msra.mxu0 0.0
        %864 = vmatpush.msra.mxu0 0.0
        %865 = vmatpush.msra.mxu0 %v845
        %866 = vmatpush.msra.mxu0 %v844
        %867 = vmatpush.msra.mxu0 %v843
        %868 = vmatpush.msra.mxu0 %v842
        %869 = vmatmul.f32.gmra.mxu0 %v851
        %v870 = vpop.f32.mrf.mxu0
        %v871 = vadd.f32 %v848, %v870
        %872 = vdwg.mxu0
        %873 = vst.msk [vmem:[%s249] sm:$0xff] %vm257, %v871
        %s874 = sand.u32 %s119, 1
        %s875 = scalar_lea.sflag [#allocation4], %s874
        %s876 = sand.u32 %s119, 1
        %s877 = smul.addr %s876, 8
        %s878 = scalar_lea.vmem [#allocation8], %s877
        // Predicated region
        $region49: #{cross_attention_forward.1} parent=35 // pred_check
          %p879 = pneg %p129
        $region50: #{cross_attention_forward.1} parent=35 // pred_check_branch
          %881 = sbr.rel (%p879) target = $region52
        $region51: #{cross_attention_forward.1} parent=35 // pred_region
          %883 = vsyncadd %s875, 0
          %s884 = smul.addr %s22, 8
          %s885 = scalar_lea.hbm %s4, %s884
          %s887 = sshll.u32 %s878, 4
          %s888 = int_to_ptr.vmem [resolvable:$true] %s887
          %s889 = sshll.u32 %s885, 4
          %s890 = int_to_ptr.hbm [resolvable:$true] %s889
          %892 = dma.vmem_to_hbm [thread:$0]  %s888, 128, %s890, %s875
        $region52: #{cross_attention_forward.1} parent=35 // pred_fallthru
          _
      $region36: #{cross_attention_forward.1} parent=5 // pred_fallthru
        _
      %p893 = scmp.le.s32.totalorder 2, %s17
      // Predicated region
      $region53: #{cross_attention_forward.1} parent=5 // pred_check
        %p894 = pneg %p893
      $region54: #{cross_attention_forward.1} parent=5 // pred_check_branch
        %896 = sbr.rel (%p894) target = $region56
      $region55: #{cross_attention_forward.1} parent=5 // pred_region
        %s897 = ssub.s32 %s17, 2
        // Predicated region
        $region57: #{cross_attention_forward.1} parent=55 // pred_check
          %p898 = pneg %p135
        $region58: #{cross_attention_forward.1} parent=55 // pred_check_branch
          %900 = sbr.rel (%p898) target = $region60
        $region59: #{cross_attention_forward.1} parent=55 // pred_region
          %s901 = sand.u32 %s120, 1
          %s902 = scalar_lea.sflag [#allocation4], %s901
          %s903 = sand.u32 %s120, 1
          %s904 = smul.addr %s903, 8
          %s905 = scalar_lea.vmem [#allocation8], %s904
          %907 = dma.done %s902, 128
        $region60: #{cross_attention_forward.1} parent=55 // pred_fallthru
          _
      $region56: #{cross_attention_forward.1} parent=5 // pred_fallthru
        _
    $region6: #{cross_attention_forward.1} parent=1 // loop_footer
      %s21 = sadd.s32 1, %s17
    $region7: #{cross_attention_forward.1} parent=1 // loop_footer_branch
      %16 = sbr.rel target = $region3
    $region8: #{cross_attention_forward.1} parent=1 // loop_exit
      _
    %908 = vsyncpa [#allocation3], 1
    %s909 = scalar_lea.sflag [#allocation3], 1
    %910 = vsyncpa %s909, 1
    %911 = vsyncpa [#allocation6], 1
    %912 = vsyncpa [#allocation4], 1
    %s913 = scalar_lea.sflag [#allocation4], 1
    %914 = vsyncpa %s913, 1

</llo_original>
